<compile_context>
chip_gen: v6e
topology: v6e:2x2x1
jax: 0.10.0
libtpu: 0.0.40
codegen_flags: <defaults>
</compile_context>

<pallas_src>
import functools
import math

import jax
import jax.numpy as jnp
import numpy as np
from jax.experimental import pallas as pl
from jax.experimental.pallas import tpu as pltpu

_PI = math.pi
_TWO_PI = 2.0 * math.pi
_LANE = 128
_SUB = 8


def _quant_kernel(seed_ref, phase_ref, *out_refs, lut, tau, tau_max, c,
                  use_gumbel, emit_noise, tm):
    """Fused hot path: per-LUT wrap -> sigmoid'(z) score via the exact tanh identity
    (already scaled by c*s/tau) -> [+ in-kernel hash-based Gumbel noise] ->
    numerically stable softmax over L -> LUT-weighted sum."""
    out_ref = out_refs[0]
    noise_ref = out_refs[1] if emit_noise else None

    L = len(lut)
    s = tau_max / tau
    amp_over_tau = (c * s) / tau          # (1 - tanh^2(z/2)) * c*s/tau == sig*(1-sig)*4*c*s/tau
    inv_tau = 1.0 / tau
    half_s = 0.5 * s / _PI                # fold the /pi normalization into the tanh argument

    phase = phase_ref[...]                # (TM, 128) f32 — used unwrapped; per-LUT mod
                                          # absorbs any multiple of 2*pi (outer wrap is a no-op)

    if use_gumbel:
        # Counter-based hash PRNG (lowbias32-style mix) over the *global* element index,
        # so the noise is deterministic regardless of the grid tiling / which core runs
        # which step, and works both under Mosaic and in interpret mode.
        seed_u = seed_ref[0].astype(jnp.uint32)
        row0 = pl.program_id(0) * tm
        r_iota = jax.lax.broadcasted_iota(jnp.int32, phase.shape, 0)
        c_iota = jax.lax.broadcasted_iota(jnp.int32, phase.shape, 1)
        idx_u = ((row0 + r_iota) * _LANE + c_iota).astype(jnp.uint32)

    # L is small and static -> fully unrolled over LUT entries.
    # TODO(synk): switch to an online (running max / denom / num) accumulation if L grows
    # past ~12-16 entries to bound live vregs.
    logits = []
    for l in range(L):
        off = _PI - lut[l]                                   # compile-time constant
        diff = jnp.mod(phase + off, _TWO_PI) - _PI
        t = jnp.tanh(half_s * diff)
        score = (1.0 - t * t) * amp_over_tau                 # == sig*(1-sig)*4*c*s/tau (exact)
        if use_gumbel:
            lc = jnp.uint32((l * 0x85EBCA6B + 0x9E3779B9) & 0xFFFFFFFF)
            x = idx_u + (seed_u + lc)
            x = x ^ (x >> jnp.uint32(16))
            x = x * jnp.uint32(0x7FEB352D)
            x = x ^ (x >> jnp.uint32(15))
            x = x * jnp.uint32(0x846CA68B)
            x = x ^ (x >> jnp.uint32(16))
            # 24-bit uniform in [0, 1)
            u = (x >> jnp.uint32(8)).astype(jnp.int32).astype(jnp.float32) * (1.0 / 16777216.0)
            g = -jnp.log(-jnp.log(u + 1e-20) + 1e-20)        # Gumbel(0, 1)
            if emit_noise:
                noise_ref[l] = g
            logits.append(score + g * inv_tau)
        else:
            logits.append(score)

    # numerically stable softmax over the L axis, fused with the LUT-weighted sum
    m = logits[0]
    for l in range(1, L):
        m = jnp.maximum(m, logits[l])
    exps = [jnp.exp(lg - m) for lg in logits]
    denom = exps[0]
    num = exps[0] * lut[0]
    for l in range(1, L):
        denom = denom + exps[l]
        num = num + exps[l] * lut[l]
    out_ref[...] = num / denom                               # sum_l softmax_l * lut_l


def _tensorcores_per_chip():
    """Best-effort TensorCore count query; defaults to 1 (v5e/v6e/CPU-interpret)."""
    try:
        info = pltpu.get_tpu_info()
    except Exception:
        return 1
    for attr in ("num_tensorcores", "tensorcores_per_chip", "num_cores", "core_count"):
        v = getattr(info, attr, None)
        if isinstance(v, int) and v > 0:
            return v
    return 1


def _choose_tm(rows, n_cores, emit_noise, L):
    """Row tile: large (<=2048 rows ~= 1 MiB f32) to amortize the ~0.35us/step pipeline
    overhead.  Split into >=2 steps only on multi-TensorCore chips (megacore); on
    single-TC chips the grid is a serial loop and splitting is pure overhead."""
    cap = 2048
    if emit_noise:
        # keep double-buffered (in + out + L*noise) under ~16 MiB (v5e scoped default)
        per_row = 2 * (2 + L) * _LANE * 4
        cap = min(cap, max(64, ((16 << 20) // per_row) // _SUB * _SUB))
    tm = min(cap, rows)
    if n_cores >= 2 and rows >= 16:
        half = -(-rows // 2)
        half = -(-half // _SUB) * _SUB
        tm = min(tm, max(_SUB, half))
    return max(_SUB, (tm // _SUB) * _SUB)


def softmax_based_quantization(phase, lut, key, *, tau=1.0, tau_max=3.0, c=300.0,
                               gumbel=True, hard=False, return_noise=False):
    """Forward pass of SoftmaxBasedQuantization.

    Returns (q_phase, noise); noise is the padded (L, R, 128) Gumbel-noise slab when
    `return_noise and gumbel`, else None (the fast path never writes noise to HBM).
    """
    # TODO(synk): hard=True straight-through one-hot path not implemented (backward-only trick).
    assert not hard
    N, C, H, W = phase.shape
    assert C == 1, "phase is expected as (N, 1, H, W)"
    lut_t = tuple(float(v) for v in np.asarray(lut).reshape(-1))
    L = len(lut_t)

    flat = phase.reshape(-1).astype(jnp.float32)
    M = flat.shape[0]
    rows = -(-M // _LANE)
    rows = -(-rows // _SUB) * _SUB

    emit_noise = bool(return_noise and gumbel)
    TM = _choose_tm(rows, _tensorcores_per_chip(), emit_noise, L)
    R = -(-rows // TM) * TM

    if R * _LANE == M:
        phase2d = flat.reshape(R, _LANE)          # aligned fast path: no pad / no slice
        padded = False
    else:
        phase2d = jnp.pad(flat, (0, R * _LANE - M)).reshape(R, _LANE)
        padded = True
    grid = (R // TM,)

    # 31-bit seed for the in-kernel counter hash, derived from the JAX key.
    seed = jax.random.randint(key, (1,), 0, jnp.iinfo(jnp.int32).max, dtype=jnp.int32)

    kernel = functools.partial(_quant_kernel, lut=lut_t, tau=float(tau),
                               tau_max=float(tau_max), c=float(c),
                               use_gumbel=bool(gumbel), emit_noise=emit_noise, tm=TM)

    q_spec = pl.BlockSpec((TM, _LANE), lambda i, s_ref: (i, 0))
    if emit_noise:
        out_shape = (jax.ShapeDtypeStruct((R, _LANE), jnp.float32),
                     jax.ShapeDtypeStruct((L, R, _LANE), jnp.float32))
        out_specs = (q_spec, pl.BlockSpec((L, TM, _LANE), lambda i, s_ref: (0, i, 0)))
    else:
        out_shape = jax.ShapeDtypeStruct((R, _LANE), jnp.float32)
        out_specs = q_spec

    n_elem = R * _LANE
    cost = pl.CostEstimate(
        flops=int((12 + 24 * L) * n_elem),
        transcendentals=int(L * (4 if gumbel else 2) * n_elem),
        bytes_accessed=int(4 * n_elem * (2 + (L if emit_noise else 0))),
    )

    res = pl.pallas_call(
        kernel,
        out_shape=out_shape,
        grid_spec=pltpu.PrefetchScalarGridSpec(
            num_scalar_prefetch=1,
            grid=grid,
            in_specs=[pl.BlockSpec((TM, _LANE), lambda i, s_ref: (i, 0))],
            out_specs=out_specs,
        ),
        compiler_params=pltpu.CompilerParams(dimension_semantics=("parallel",)),
        cost_estimate=cost,
    )(seed, phase2d)

    if emit_noise:
        out2d, noise = res
    else:
        out2d, noise = res, None

    if padded:
        q = out2d.reshape(-1)[:M].reshape(N, 1, H, W)
    else:
        q = out2d.reshape(N, 1, H, W)
    return q, noise


def _reference(phase, lut, noise, *, tau, tau_max, c):
    """Pure-JAX reference faithful to the PyTorch module (sigmoid score, double wrap).
    `noise` is the padded (L, R, 128) slab produced by the kernel, or None."""
    N, _, H, W = phase.shape
    lutf = jnp.asarray(np.asarray(lut).reshape(-1), jnp.float32)
    L = lutf.shape[0]
    flat = phase.reshape(-1).astype(jnp.float32)
    M = flat.shape[0]
    s = tau_max / tau
    pw = jnp.mod(flat + _PI, _TWO_PI) - _PI
    pw = jnp.mod(pw + _PI, _TWO_PI) - _PI             # spec's (redundant) second wrap
    diff = (jnp.mod(pw[None, :] - lutf[:, None] + _PI, _TWO_PI) - _PI) / _PI
    sig = jax.nn.sigmoid(s * diff)
    scores = sig * (1.0 - sig) * 4.0 * c * s
    if noise is not None:
        logits = (scores + noise.reshape(L, -1)[:, :M]) / tau
    else:
        logits = scores / tau
    y = jax.nn.softmax(logits, axis=0)
    return (y * lutf[:, None]).sum(0).reshape(N, 1, H, W)


if __name__ == "__main__":
    key = jax.random.PRNGKey(0)
    k_phase, k_gumbel = jax.random.split(key)

    N, H, W = 2, 16, 16
    phase = jax.random.uniform(k_phase, (N, 1, H, W), dtype=jnp.float32,
                               minval=-2.0 * math.pi, maxval=2.0 * math.pi)
    L = 4
    lut = np.linspace(-math.pi, math.pi, L, endpoint=False).astype(np.float32)

    # 1) deterministic soft path (gumbel=False): compare against pure-JAX reference.
    q_soft, _ = softmax_based_quantization(phase, lut, k_gumbel, tau=1.0, tau_max=3.0,
                                           c=300.0, gumbel=False)
    q_soft = jax.block_until_ready(q_soft)
    ref_soft = _reference(phase, lut, None, tau=1.0, tau_max=3.0, c=300.0)
    np.testing.assert_allclose(np.asarray(q_soft), np.asarray(ref_soft),
                               rtol=2e-3, atol=2e-3)

    # 2) gumbel path with noise emitted, so the reference can reproduce it exactly.
    q_g, noise = softmax_based_quantization(phase, lut, k_gumbel, tau=1.0, tau_max=3.0,
                                            c=300.0, gumbel=True, return_noise=True)
    q_g = jax.block_until_ready(q_g)
    assert noise is not None and noise.shape[0] == L
    ref_g = _reference(phase, lut, noise, tau=1.0, tau_max=3.0, c=300.0)
    np.testing.assert_allclose(np.asarray(q_g), np.asarray(ref_g), rtol=2e-3, atol=2e-3)

    # 3) production path: Gumbel noise generated in-kernel, never written to HBM.
    q_fast, none_noise = softmax_based_quantization(phase, lut, k_gumbel, tau=1.0,
                                                    tau_max=3.0, c=300.0, gumbel=True)
    q_fast = jax.block_until_ready(q_fast)
    assert none_noise is None
    assert q_fast.shape == (N, 1, H, W) and q_fast.dtype == jnp.float32
    assert bool(jnp.all(jnp.isfinite(q_fast)))
    assert bool(jnp.all(q_fast >= float(lut.min()) - 1e-4))
    assert bool(jnp.all(q_fast <= float(lut.max()) + 1e-4))
    # noise depends only on (seed, lut index, global element index) => matches the
    # noise-emitting run regardless of tiling.
    np.testing.assert_allclose(np.asarray(q_fast), np.asarray(q_g), rtol=1e-3, atol=1e-3)

    print("KERNEL_OK")
</pallas_src>

<mosaic_0001>
module attributes {stable_mosaic.version = 11 : i64} {
  func.func @_quant_kernel(%arg0: i32, %arg1: memref<1xi32, #tpu.memory_space<smem>>, %arg2: memref<8x128xf32, #tpu.memory_space<vmem>>, %arg3: memref<8x128xf32, #tpu.memory_space<vmem>>) attributes {dimension_semantics = [#tpu.dimension_semantics<parallel>], iteration_bounds = array<i64: 1>, scalar_prefetch = 1 : i64, scratch_operands = 0 : i64, tpu.core_type = #tpu.core_type<tc>, window_params = [{transform_indices = @transform_0, window_bounds = array<i64: 8, 128>}, {transform_indices = @transform_1, window_bounds = array<i64: 8, 128>}]} {
    %c0 = arith.constant 0 : index
    %c0_0 = arith.constant 0 : index
    %0 = vector.load %arg2[%c0, %c0_0] : memref<8x128xf32, #tpu.memory_space<vmem>>, vector<8x128xf32>
    %cst = arith.constant 6.28318548 : f32
    %1 = vector.broadcast %cst : f32 to vector<8x128xf32>
    %2 = arith.addf %0, %1 : vector<8x128xf32>
    %cst_1 = arith.constant 6.28318548 : f32
    %3 = vector.broadcast %cst_1 : f32 to vector<8x128xf32>
    %4 = arith.remf %2, %3 : vector<8x128xf32>
    %cst_2 = arith.constant 0.000000e+00 : f32
    %5 = vector.broadcast %cst_2 : f32 to vector<8x128xf32>
    %6 = arith.cmpf one, %4, %5 : vector<8x128xf32>
    %cst_3 = arith.constant 0.000000e+00 : f32
    %7 = vector.broadcast %cst_3 : f32 to vector<8x128xf32>
    %8 = arith.cmpf olt, %4, %7 : vector<8x128xf32>
    %cst_4 = arith.constant 0.000000e+00 : f32
    %9 = arith.cmpf olt, %cst_1, %cst_4 : f32
    %10 = vector.broadcast %9 : i1 to vector<8x128xi1>
    %11 = vector.broadcast %10 : vector<8x128xi1> to vector<8x128xi1>
    %12 = arith.xori %8, %11 : vector<8x128xi1>
    %13 = arith.andi %12, %6 : vector<8x128xi1>
    %14 = vector.broadcast %cst_1 : f32 to vector<8x128xf32>
    %15 = arith.addf %4, %14 : vector<8x128xf32>
    %16 = arith.select %13, %15, %4 : vector<8x128xi1>, vector<8x128xf32>
    %cst_5 = arith.constant 3.14159274 : f32
    %17 = vector.broadcast %cst_5 : f32 to vector<8x128xf32>
    %18 = arith.subf %16, %17 : vector<8x128xf32>
    %cst_6 = arith.constant 0.477464825 : f32
    %19 = vector.broadcast %cst_6 : f32 to vector<8x128xf32>
    %20 = arith.mulf %19, %18 : vector<8x128xf32>
    %21 = math.tanh %20 : vector<8x128xf32>
    %22 = arith.mulf %21, %21 : vector<8x128xf32>
    %cst_7 = arith.constant 1.000000e+00 : f32
    %23 = vector.broadcast %cst_7 : f32 to vector<8x128xf32>
    %24 = arith.subf %23, %22 : vector<8x128xf32>
    %cst_8 = arith.constant 9.000000e+02 : f32
    %25 = vector.broadcast %cst_8 : f32 to vector<8x128xf32>
    %26 = arith.mulf %24, %25 : vector<8x128xf32>
    %cst_9 = arith.constant 4.71238899 : f32
    %27 = vector.broadcast %cst_9 : f32 to vector<8x128xf32>
    %28 = arith.addf %0, %27 : vector<8x128xf32>
    %cst_10 = arith.constant 6.28318548 : f32
    %29 = vector.broadcast %cst_10 : f32 to vector<8x128xf32>
    %30 = arith.remf %28, %29 : vector<8x128xf32>
    %cst_11 = arith.constant 0.000000e+00 : f32
    %31 = vector.broadcast %cst_11 : f32 to vector<8x128xf32>
    %32 = arith.cmpf one, %30, %31 : vector<8x128xf32>
    %cst_12 = arith.constant 0.000000e+00 : f32
    %33 = vector.broadcast %cst_12 : f32 to vector<8x128xf32>
    %34 = arith.cmpf olt, %30, %33 : vector<8x128xf32>
    %cst_13 = arith.constant 0.000000e+00 : f32
    %35 = arith.cmpf olt, %cst_10, %cst_13 : f32
    %36 = vector.broadcast %35 : i1 to vector<8x128xi1>
    %37 = vector.broadcast %36 : vector<8x128xi1> to vector<8x128xi1>
    %38 = arith.xori %34, %37 : vector<8x128xi1>
    %39 = arith.andi %38, %32 : vector<8x128xi1>
    %40 = vector.broadcast %cst_10 : f32 to vector<8x128xf32>
    %41 = arith.addf %30, %40 : vector<8x128xf32>
    %42 = arith.select %39, %41, %30 : vector<8x128xi1>, vector<8x128xf32>
    %cst_14 = arith.constant 3.14159274 : f32
    %43 = vector.broadcast %cst_14 : f32 to vector<8x128xf32>
    %44 = arith.subf %42, %43 : vector<8x128xf32>
    %cst_15 = arith.constant 0.477464825 : f32
    %45 = vector.broadcast %cst_15 : f32 to vector<8x128xf32>
    %46 = arith.mulf %45, %44 : vector<8x128xf32>
    %47 = math.tanh %46 : vector<8x128xf32>
    %48 = arith.mulf %47, %47 : vector<8x128xf32>
    %cst_16 = arith.constant 1.000000e+00 : f32
    %49 = vector.broadcast %cst_16 : f32 to vector<8x128xf32>
    %50 = arith.subf %49, %48 : vector<8x128xf32>
    %cst_17 = arith.constant 9.000000e+02 : f32
    %51 = vector.broadcast %cst_17 : f32 to vector<8x128xf32>
    %52 = arith.mulf %50, %51 : vector<8x128xf32>
    %cst_18 = arith.constant 3.14159274 : f32
    %53 = vector.broadcast %cst_18 : f32 to vector<8x128xf32>
    %54 = arith.addf %0, %53 : vector<8x128xf32>
    %cst_19 = arith.constant 6.28318548 : f32
    %55 = vector.broadcast %cst_19 : f32 to vector<8x128xf32>
    %56 = arith.remf %54, %55 : vector<8x128xf32>
    %cst_20 = arith.constant 0.000000e+00 : f32
    %57 = vector.broadcast %cst_20 : f32 to vector<8x128xf32>
    %58 = arith.cmpf one, %56, %57 : vector<8x128xf32>
    %cst_21 = arith.constant 0.000000e+00 : f32
    %59 = vector.broadcast %cst_21 : f32 to vector<8x128xf32>
    %60 = arith.cmpf olt, %56, %59 : vector<8x128xf32>
    %cst_22 = arith.constant 0.000000e+00 : f32
    %61 = arith.cmpf olt, %cst_19, %cst_22 : f32
    %62 = vector.broadcast %61 : i1 to vector<8x128xi1>
    %63 = vector.broadcast %62 : vector<8x128xi1> to vector<8x128xi1>
    %64 = arith.xori %60, %63 : vector<8x128xi1>
    %65 = arith.andi %64, %58 : vector<8x128xi1>
    %66 = vector.broadcast %cst_19 : f32 to vector<8x128xf32>
    %67 = arith.addf %56, %66 : vector<8x128xf32>
    %68 = arith.select %65, %67, %56 : vector<8x128xi1>, vector<8x128xf32>
    %cst_23 = arith.constant 3.14159274 : f32
    %69 = vector.broadcast %cst_23 : f32 to vector<8x128xf32>
    %70 = arith.subf %68, %69 : vector<8x128xf32>
    %cst_24 = arith.constant 0.477464825 : f32
    %71 = vector.broadcast %cst_24 : f32 to vector<8x128xf32>
    %72 = arith.mulf %71, %70 : vector<8x128xf32>
    %73 = math.tanh %72 : vector<8x128xf32>
    %74 = arith.mulf %73, %73 : vector<8x128xf32>
    %cst_25 = arith.constant 1.000000e+00 : f32
    %75 = vector.broadcast %cst_25 : f32 to vector<8x128xf32>
    %76 = arith.subf %75, %74 : vector<8x128xf32>
    %cst_26 = arith.constant 9.000000e+02 : f32
    %77 = vector.broadcast %cst_26 : f32 to vector<8x128xf32>
    %78 = arith.mulf %76, %77 : vector<8x128xf32>
    %cst_27 = arith.constant 1.57079625 : f32
    %79 = vector.broadcast %cst_27 : f32 to vector<8x128xf32>
    %80 = arith.addf %0, %79 : vector<8x128xf32>
    %cst_28 = arith.constant 6.28318548 : f32
    %81 = vector.broadcast %cst_28 : f32 to vector<8x128xf32>
    %82 = arith.remf %80, %81 : vector<8x128xf32>
    %cst_29 = arith.constant 0.000000e+00 : f32
    %83 = vector.broadcast %cst_29 : f32 to vector<8x128xf32>
    %84 = arith.cmpf one, %82, %83 : vector<8x128xf32>
    %cst_30 = arith.constant 0.000000e+00 : f32
    %85 = vector.broadcast %cst_30 : f32 to vector<8x128xf32>
    %86 = arith.cmpf olt, %82, %85 : vector<8x128xf32>
    %cst_31 = arith.constant 0.000000e+00 : f32
    %87 = arith.cmpf olt, %cst_28, %cst_31 : f32
    %88 = vector.broadcast %87 : i1 to vector<8x128xi1>
    %89 = vector.broadcast %88 : vector<8x128xi1> to vector<8x128xi1>
    %90 = arith.xori %86, %89 : vector<8x128xi1>
    %91 = arith.andi %90, %84 : vector<8x128xi1>
    %92 = vector.broadcast %cst_28 : f32 to vector<8x128xf32>
    %93 = arith.addf %82, %92 : vector<8x128xf32>
    %94 = arith.select %91, %93, %82 : vector<8x128xi1>, vector<8x128xf32>
    %cst_32 = arith.constant 3.14159274 : f32
    %95 = vector.broadcast %cst_32 : f32 to vector<8x128xf32>
    %96 = arith.subf %94, %95 : vector<8x128xf32>
    %cst_33 = arith.constant 0.477464825 : f32
    %97 = vector.broadcast %cst_33 : f32 to vector<8x128xf32>
    %98 = arith.mulf %97, %96 : vector<8x128xf32>
    %99 = math.tanh %98 : vector<8x128xf32>
    %100 = arith.mulf %99, %99 : vector<8x128xf32>
    %cst_34 = arith.constant 1.000000e+00 : f32
    %101 = vector.broadcast %cst_34 : f32 to vector<8x128xf32>
    %102 = arith.subf %101, %100 : vector<8x128xf32>
    %cst_35 = arith.constant 9.000000e+02 : f32
    %103 = vector.broadcast %cst_35 : f32 to vector<8x128xf32>
    %104 = arith.mulf %102, %103 : vector<8x128xf32>
    %105 = arith.maximumf %26, %52 : vector<8x128xf32>
    %106 = arith.maximumf %105, %78 : vector<8x128xf32>
    %107 = arith.maximumf %106, %104 : vector<8x128xf32>
    %108 = arith.subf %26, %107 : vector<8x128xf32>
    %109 = math.exp %108 : vector<8x128xf32>
    %110 = arith.subf %52, %107 : vector<8x128xf32>
    %111 = math.exp %110 : vector<8x128xf32>
    %112 = arith.subf %78, %107 : vector<8x128xf32>
    %113 = math.exp %112 : vector<8x128xf32>
    %114 = arith.subf %104, %107 : vector<8x128xf32>
    %115 = math.exp %114 : vector<8x128xf32>
    %cst_36 = arith.constant -3.14159274 : f32
    %116 = vector.broadcast %cst_36 : f32 to vector<8x128xf32>
    %117 = arith.mulf %109, %116 : vector<8x128xf32>
    %118 = arith.addf %109, %111 : vector<8x128xf32>
    %cst_37 = arith.constant -1.57079637 : f32
    %119 = vector.broadcast %cst_37 : f32 to vector<8x128xf32>
    %120 = arith.mulf %111, %119 : vector<8x128xf32>
    %121 = arith.addf %117, %120 : vector<8x128xf32>
    %122 = arith.addf %118, %113 : vector<8x128xf32>
    %cst_38 = arith.constant 0.000000e+00 : f32
    %123 = vector.broadcast %cst_38 : f32 to vector<8x128xf32>
    %124 = arith.mulf %113, %123 : vector<8x128xf32>
    %125 = arith.addf %121, %124 : vector<8x128xf32>
    %126 = arith.addf %122, %115 : vector<8x128xf32>
    %cst_39 = arith.constant 1.57079637 : f32
    %127 = vector.broadcast %cst_39 : f32 to vector<8x128xf32>
    %128 = arith.mulf %115, %127 : vector<8x128xf32>
    %129 = arith.addf %125, %128 : vector<8x128xf32>
    %130 = arith.divf %129, %126 : vector<8x128xf32>
    %c0_40 = arith.constant 0 : index
    %c0_41 = arith.constant 0 : index
    %131 = vector.load %arg3[%c0_40, %c0_41] : memref<8x128xf32, #tpu.memory_space<vmem>>, vector<8x128xf32>
    tpu.vector_store %arg3[%c0_40, %c0_41], %130 {strides = array<i32>} : memref<8x128xf32, #tpu.memory_space<vmem>>, vector<8x128xf32>,
    return
  }
  func.func @transform_0(%arg0: i32, %arg1: memref<1xi32, #tpu.memory_space<smem>>) -> (i32, i32) {
    %c0_i32 = arith.constant 0 : i32
    %c0_i32_0 = arith.constant 0 : i32
    return %arg0, %c0_i32 : i32, i32
  }
  func.func @transform_1(%arg0: i32, %arg1: memref<1xi32, #tpu.memory_space<smem>>) -> (i32, i32) {
    %c0_i32 = arith.constant 0 : i32
    %c0_i32_0 = arith.constant 0 : i32
    return %arg0, %c0_i32 : i32, i32
  }
}

</mosaic_0001>

<llo_original>
// kernel: tpu_custom_call.1
$region0: #{tpu_custom_call.1}
  #allocation0 [shape = 'u32[]', space=smem, size = 0x4, offset = 0x4, fixed_abs, tag = 'smem constant byte address 0x4 - core index']
  #allocation1 [shape = 'u32[144,128]{1,0:T(1,128)}', space=vmem, size = 0x12000, scoped, tag = 'internal scratch']
  #allocation2 [shape = 's32[1]{0}', space=sflag, size = 0x4, scoped, tag = 'scoped memory for tpu_custom_call.1']
  #allocation3 [shape = 's32[1]{0:T(128)S(6)}', space=smem, size = 0x200, scoped, tag = 'prefetched SMEM operand 0']
  %s0 = inlined_call_operand.<no memory space> [shape: s32[1], index: 0, kind: input, shape index: {}]
  %s1 = inlined_call_operand.hbm [shape: f32[8,128], index: 1, kind: input, shape index: {}]
  %s2 = inlined_call_operand.hbm [shape: f32[8,128], index: 2, kind: output, shape index: {}]
  %s3 = sld [smem:[#allocation0]]
  $region18: #{tpu_custom_call.1} parent=0
    _
  %s5 = ssub.s32 1, %s3
  %s6 = scalar_select 0, %s5, %s3
  %7 = sst [smem:[#allocation3]] %s0
  $region1: #{tpu_custom_call.1} parent=0
    #allocation4 [shape = 'u8[4096]{0}', space=vmem, size = 0x1000, scoped, tag = 'input window, operand 1, single buffered']
    #allocation5 [shape = 's32[1]{0}', space=sflag, size = 0x4, scoped, tag = 'scoped memory for tpu_custom_call.1']
    #allocation6 [shape = 's32[1]{0}', space=sflag, size = 0x4, scoped, tag = 'scoped memory for tpu_custom_call.1']
    #allocation7 [shape = 'u8[4096]{0}', space=vmem, size = 0x1000, scoped, tag = 'output window, operand 0, single buffered']
    %8 = vsyncpa [#allocation5], 0
    %9 = vsyncpa [#allocation6], 0
    // Predicated region
    $region2: #{tpu_custom_call.1} parent=1 // pred_check
      _
    $region3: #{tpu_custom_call.1} parent=1 // pred_check_branch
      %11 = sbr.rel (0) target = $region5
    $region4: #{tpu_custom_call.1} parent=1 // pred_region
      %s13 = ssub.s32 128, 128
      %14 = vsyncadd [#allocation5], %s13
      %s16 = sshll.u32 [#allocation4], 4
      %s17 = int_to_ptr.vmem [resolvable:$true] %s16
      %19 = dma.hbm_to_vmem [thread:$0]  %s1, 128, %s17, [#allocation5]
    $region5: #{tpu_custom_call.1} parent=1 // pred_fallthru
      _
    // Predicated region
    $region6: #{tpu_custom_call.1} parent=1 // pred_check
      _
    $region7: #{tpu_custom_call.1} parent=1 // pred_check_branch
      %21 = sbr.rel (0) target = $region9
    $region8: #{tpu_custom_call.1} parent=1 // pred_region
      %22 = dma.done [#allocation5], 128
    $region9: #{tpu_custom_call.1} parent=1 // pred_fallthru
      _
    %v23 = vld [vmem:[#allocation4] sm:$0xff]
    %v24 = vadd.f32 %v23, 6.2831855
    %v25 = vand.u32 2147483647, %v24
    %v26 = vrcp.pop 6.2831855
    %v27 = vmul.f32 %v25, %v26
    %v28 = vfloor.f32 %v27
    %v29 = vmul.f32 %v28, 6.2831855
    %v30 = vsub.f32 %v25, %v29
    %vm31 = vcmp.eq.f32.partialorder %v30, 6.2831855
    %v32 = vsel %vm31, 0.0, %v30
    %v33 = vand.u32 2147483647, %v32
    %v34 = vand.u32 %v24, 2147483648
    %v35 = vor.u32 %v33, %v34
    %vm36 = vcmp.ne.f32.partialorder %v35, 0.0
    %vm37 = vcmp.lt.f32.partialorder %v35, 0.0
    %vm38 = vmand %vm37, %vm36
    %v39 = vadd.f32 %v35, 6.2831855
    %v40 = vsel %vm38, %v39, %v35
    %v41 = vsub.f32 %v40, 3.1415927
    %v42 = vmul.f32 %v41, 0.47746482
    %v43 = vtanh.pop %v42
    %v44 = vmul.f32 %v43, %v43
    %v45 = vsub.f32 1.0, %v44
    %v46 = vmul.f32 %v45, 900.0
    %v47 = vadd.f32 %v23, 4.712389
    %v48 = vand.u32 2147483647, %v47
    %v49 = vrcp.pop 6.2831855
    %v50 = vmul.f32 %v48, %v49
    %v51 = vfloor.f32 %v50
    %v52 = vmul.f32 %v51, 6.2831855
    %v53 = vsub.f32 %v48, %v52
    %vm54 = vcmp.eq.f32.partialorder %v53, 6.2831855
    %v55 = vsel %vm54, 0.0, %v53
    %v56 = vand.u32 2147483647, %v55
    %v57 = vand.u32 %v47, 2147483648
    %v58 = vor.u32 %v56, %v57
    %vm59 = vcmp.ne.f32.partialorder %v58, 0.0
    %vm60 = vcmp.lt.f32.partialorder %v58, 0.0
    %vm61 = vmand %vm60, %vm59
    %v62 = vadd.f32 %v58, 6.2831855
    %v63 = vsel %vm61, %v62, %v58
    %v64 = vsub.f32 %v63, 3.1415927
    %v65 = vmul.f32 %v64, 0.47746482
    %v66 = vtanh.pop %v65
    %v67 = vmul.f32 %v66, %v66
    %v68 = vsub.f32 1.0, %v67
    %v69 = vmul.f32 %v68, 900.0
    %v70 = vadd.f32 %v23, 3.1415927
    %v71 = vand.u32 2147483647, %v70
    %v72 = vrcp.pop 6.2831855
    %v73 = vmul.f32 %v71, %v72
    %v74 = vfloor.f32 %v73
    %v75 = vmul.f32 %v74, 6.2831855
    %v76 = vsub.f32 %v71, %v75
    %vm77 = vcmp.eq.f32.partialorder %v76, 6.2831855
    %v78 = vsel %vm77, 0.0, %v76
    %v79 = vand.u32 2147483647, %v78
    %v80 = vand.u32 %v70, 2147483648
    %v81 = vor.u32 %v79, %v80
    %vm82 = vcmp.ne.f32.partialorder %v81, 0.0
    %vm83 = vcmp.lt.f32.partialorder %v81, 0.0
    %vm84 = vmand %vm83, %vm82
    %v85 = vadd.f32 %v81, 6.2831855
    %v86 = vsel %vm84, %v85, %v81
    %v87 = vsub.f32 %v86, 3.1415927
    %v88 = vmul.f32 %v87, 0.47746482
    %v89 = vtanh.pop %v88
    %v90 = vmul.f32 %v89, %v89
    %v91 = vsub.f32 1.0, %v90
    %v92 = vmul.f32 %v91, 900.0
    %v93 = vadd.f32 %v23, 1.5707963
    %v94 = vand.u32 2147483647, %v93
    %v95 = vrcp.pop 6.2831855
    %v96 = vmul.f32 %v94, %v95
    %v97 = vfloor.f32 %v96
    %v98 = vmul.f32 %v97, 6.2831855
    %v99 = vsub.f32 %v94, %v98
    %vm100 = vcmp.eq.f32.partialorder %v99, 6.2831855
    %v101 = vsel %vm100, 0.0, %v99
    %v102 = vand.u32 2147483647, %v101
    %v103 = vand.u32 %v93, 2147483648
    %v104 = vor.u32 %v102, %v103
    %vm105 = vcmp.ne.f32.partialorder %v104, 0.0
    %vm106 = vcmp.lt.f32.partialorder %v104, 0.0
    %vm107 = vmand %vm106, %vm105
    %v108 = vadd.f32 %v104, 6.2831855
    %v109 = vsel %vm107, %v108, %v104
    %v110 = vsub.f32 %v109, 3.1415927
    %v111 = vmul.f32 %v110, 0.47746482
    %v112 = vtanh.pop %v111
    %v113 = vmul.f32 %v112, %v112
    %v114 = vsub.f32 1.0, %v113
    %v115 = vmul.f32 %v114, 900.0
    %v116 = vmax.f32 %v46, %v69
    %v117 = vmax.f32 %v116, %v92
    %v118 = vmax.f32 %v117, %v115
    %v119 = vsub.f32 %v46, %v118
    %v120 = vmul.f32 %v119, 1.442695
    %v121 = vpow.pop %v120
    %v122 = vsub.f32 %v69, %v118
    %v123 = vmul.f32 %v122, 1.442695
    %v124 = vpow.pop %v123
    %v125 = vsub.f32 %v92, %v118
    %v126 = vmul.f32 %v125, 1.442695
    %v127 = vpow.pop %v126
    %v128 = vsub.f32 %v115, %v118
    %v129 = vmul.f32 %v128, 1.442695
    %v130 = vpow.pop %v129
    %v131 = vmul.f32 %v121, -3.1415927
    %v132 = vadd.f32 %v121, %v124
    %v133 = vmul.f32 %v124, -1.5707964
    %v134 = vadd.f32 %v131, %v133
    %v135 = vadd.f32 %v132, %v127
    %v136 = vmul.f32 %v127, 0.0
    %v137 = vadd.f32 %v134, %v136
    %v138 = vadd.f32 %v135, %v130
    %v139 = vmul.f32 %v130, 1.5707964
    %v140 = vadd.f32 %v137, %v139
    %v141 = vrcp.pop %v138
    %v142 = vmul.f32 %v140, %v141
    %143 = vst [vmem:[#allocation7] sm:$0xff] %v142
    // Predicated region
    $region10: #{tpu_custom_call.1} parent=1 // pred_check
      _
    $region11: #{tpu_custom_call.1} parent=1 // pred_check_branch
      %145 = sbr.rel (0) target = $region13
    $region12: #{tpu_custom_call.1} parent=1 // pred_region
      %s147 = ssub.s32 128, 128
      %148 = vsyncadd [#allocation6], %s147
      %s150 = sshll.u32 [#allocation7], 4
      %s151 = int_to_ptr.vmem [resolvable:$true] %s150
      %153 = dma.vmem_to_hbm [thread:$0]  %s151, 128, %s2, [#allocation6]
    $region13: #{tpu_custom_call.1} parent=1 // pred_fallthru
      _
    // Predicated region
    $region14: #{tpu_custom_call.1} parent=1 // pred_check
      _
    $region15: #{tpu_custom_call.1} parent=1 // pred_check_branch
      %155 = sbr.rel (0) target = $region17
    $region16: #{tpu_custom_call.1} parent=1 // pred_region
      %156 = dma.done [#allocation6], 128
    $region17: #{tpu_custom_call.1} parent=1 // pred_fallthru
      _
    %157 = vsyncpa [#allocation5], 1
    %158 = vsyncpa [#allocation6], 1

</llo_original>
